<compile_context>
chip_gen: v5e
topology: v5e:2x2
jax: 0.10.0
libtpu: 0.0.40
codegen_flags: <defaults>
</compile_context>

<pallas_src>
import jax
import jax.numpy as jnp
from jax.experimental import pallas as pl
from jax.experimental.pallas import tpu as pltpu


def _logreg_kernel(x_ref, w_ref, b_ref, o_ref):
    # x_ref: (TB, F), w_ref: (F, 1)  (x/w dtype, possibly bf16)
    # b_ref: (1,) f32 in SMEM, o_ref: (TB, 1) f32
    z = jnp.dot(x_ref[...], w_ref[...], preferred_element_type=jnp.float32)
    z = z + b_ref[0]                       # f32 bias add on the tiny (TB,1) result
    o_ref[...] = jax.nn.sigmoid(z).astype(o_ref.dtype)   # exp -> EUP


def _round_up(n, m):
    return ((n + m - 1) // m) * m


def logistic_regression(x, w, b, *, block_batch=1024, input_dtype=None):
    """sigmoid(x @ w + b).  x: (B, F), w: (F, 1), b: (1,)  ->  (B, 1) f32."""
    B, F = x.shape
    if input_dtype is not None:
        # e.g. bf16: halves HBM traffic; matmul still accumulates in f32.
        x = x.astype(input_dtype)
    w = w.astype(x.dtype)
    b = jnp.asarray(b, jnp.float32).reshape(1)

    # Batch tile: big enough to hit the HBM roofline, small enough that the
    # double-buffered x tile stays within a ~16 MiB budget (safe on v7x too).
    itemsize = jnp.dtype(x.dtype).itemsize
    budget = 16 * 1024 * 1024
    tb_cap = max(8, (budget // (2 * F * itemsize)) // 8 * 8)
    TB = int(min(block_batch, tb_cap, _round_up(B, 8)))
    TB = max(8, (TB // 8) * 8)

    B_pad = pl.cdiv(B, TB) * TB
    if B_pad != B:
        x = jnp.pad(x, ((0, B_pad - B), (0, 0)))   # padded rows sliced off below
    grid = (B_pad // TB,)

    out = pl.pallas_call(
        _logreg_kernel,
        out_shape=jax.ShapeDtypeStruct((B_pad, 1), jnp.float32),
        grid_spec=pltpu.PrefetchScalarGridSpec(
            num_scalar_prefetch=0,
            grid=grid,
            in_specs=[
                # batch tile of x: double-buffered by the Pallas pipeline
                pl.BlockSpec((TB, F), lambda i: (i, 0)),
                # weight: invariant index_map -> held resident in VMEM
                pl.BlockSpec((F, 1), lambda i: (0, 0)),
                # bias: one scalar in SMEM, no padded VMEM block / per-tile DMA
                pl.BlockSpec(memory_space=pltpu.MemorySpace.SMEM),
            ],
            out_specs=pl.BlockSpec((TB, 1), lambda i: (i, 0)),
        ),
        compiler_params=pltpu.CompilerParams(
            # batch tiles are independent -> both v7x TCs can split them
            dimension_semantics=("parallel",),
            vmem_limit_bytes=64 * 1024 * 1024,
        ),
    )(x, w, b)
    return out[:B]


if __name__ == "__main__":
    key = jax.random.PRNGKey(0)
    kx, kw, kb, kx2 = jax.random.split(key, 4)

    # Small shapes consistent with the module: batch=8, n_input_features=32.
    B, F = 8, 32
    bound = 1.0 / jnp.sqrt(jnp.float32(F))   # mirrors nn.Linear's U(-1/sqrt(F), 1/sqrt(F))
    x = jax.random.normal(kx, (B, F), dtype=jnp.float32)
    w = jax.random.uniform(kw, (F, 1), minval=-bound, maxval=bound, dtype=jnp.float32)
    b = jax.random.uniform(kb, (1,), minval=-bound, maxval=bound, dtype=jnp.float32)

    # f32 path: exact cross-check against plain JAX.
    y = logistic_regression(x, w, b)
    jax.block_until_ready(y)
    y_ref = jax.nn.sigmoid(x @ w + b)
    assert y.shape == (B, 1)
    assert jnp.allclose(y, y_ref, atol=1e-5, rtol=1e-5)

    # Multi-tile path (B not a multiple of the tile -> pad + slice) with bf16
    # inputs to halve HBM reads; accumulation stays f32 on the MXU.
    B2 = 200
    x2 = jax.random.normal(kx2, (B2, F), dtype=jnp.float32)
    y2 = logistic_regression(x2, w, b, block_batch=64, input_dtype=jnp.bfloat16)
    jax.block_until_ready(y2)
    y2_ref = jax.nn.sigmoid(x2 @ w + b)
    assert y2.shape == (B2, 1)
    assert jnp.allclose(y2, y2_ref, atol=2e-2, rtol=2e-2)

    print("KERNEL_OK")
</pallas_src>

<mosaic_0001>
module attributes {stable_mosaic.version = 11 : i64} {
  func.func @_logreg_kernel(%arg0: i32, %arg1: memref<8x32xf32, #tpu.memory_space<vmem>>, %arg2: memref<32x1xf32, #tpu.memory_space<vmem>>, %arg3: memref<1xf32, #tpu.memory_space<smem>>, %arg4: memref<8x1xf32, #tpu.memory_space<vmem>>) attributes {dimension_semantics = [#tpu.dimension_semantics<parallel>], iteration_bounds = array<i64: 1>, scalar_prefetch = 0 : i64, scratch_operands = 0 : i64, tpu.core_type = #tpu.core_type<tc>, window_params = [{transform_indices = @transform_0, window_bounds = array<i64: 8, 32>}, {pipeline_mode = #tpu.pipeline_mode<synchronous>, transform_indices = @transform_1, window_bounds = array<i64: 32, 1>}, {transform_indices = @transform_2, window_bounds = array<i64: 1>}, {transform_indices = @transform_3, window_bounds = array<i64: 8, 1>}]} {
    %c0 = arith.constant 0 : index
    %c0_0 = arith.constant 0 : index
    %0 = vector.load %arg1[%c0, %c0_0] : memref<8x32xf32, #tpu.memory_space<vmem>>, vector<8x32xf32>
    %c0_1 = arith.constant 0 : index
    %c0_2 = arith.constant 0 : index
    %1 = vector.load %arg2[%c0_1, %c0_2] : memref<32x1xf32, #tpu.memory_space<vmem>>, vector<32x1xf32>
    %cst = arith.constant dense<0.000000e+00> : vector<8x1xf32>
    %2 = tpu.matmul %0, %1, %cst {dimension_numbers = #tpu.dot_dimension_numbers<[1], [0], [0], [1], [0, 0, 1, 1], [], []>} : vector<8x32xf32>, vector<32x1xf32>, vector<8x1xf32> -> vector<8x1xf32>
    %c0_3 = arith.constant 0 : index
    %3 = memref.load %arg3[%c0_3] : memref<1xf32, #tpu.memory_space<smem>>
    %4 = vector.broadcast %3 : f32 to vector<8x1xf32>
    %5 = arith.addf %2, %4 : vector<8x1xf32>
    %6 = arith.negf %5 : vector<8x1xf32>
    %7 = math.exp %6 : vector<8x1xf32>
    %cst_4 = arith.constant 1.000000e+00 : f32
    %8 = vector.broadcast %cst_4 : f32 to vector<8x1xf32>
    %9 = arith.addf %8, %7 : vector<8x1xf32>
    %10 = arith.divf %8, %9 : vector<8x1xf32>
    %c0_5 = arith.constant 0 : index
    %c0_6 = arith.constant 0 : index
    %11 = vector.load %arg4[%c0_5, %c0_6] : memref<8x1xf32, #tpu.memory_space<vmem>>, vector<8x1xf32>
    tpu.vector_store %arg4[%c0_5, %c0_6], %10 {strides = array<i32>} : memref<8x1xf32, #tpu.memory_space<vmem>>, vector<8x1xf32>,
    return
  }
  func.func @transform_0(%arg0: i32) -> (i32, i32) {
    %c0_i32 = arith.constant 0 : i32
    %c0_i32_0 = arith.constant 0 : i32
    return %arg0, %c0_i32 : i32, i32
  }
  func.func @transform_1(%arg0: i32) -> (i32, i32) {
    %c0_i32 = arith.constant 0 : i32
    %c0_i32_0 = arith.constant 0 : i32
    %c0_i32_1 = arith.constant 0 : i32
    return %c0_i32, %c0_i32_0 : i32, i32
  }
  func.func @transform_2(%arg0: i32) -> i32 {
    %c0_i32 = arith.constant 0 : i32
    %c0_i32_0 = arith.constant 0 : i32
    return %c0_i32 : i32
  }
  func.func @transform_3(%arg0: i32) -> (i32, i32) {
    %c0_i32 = arith.constant 0 : i32
    %c0_i32_0 = arith.constant 0 : i32
    return %arg0, %c0_i32 : i32, i32
  }
}

</mosaic_0001>

<llo_original>
// kernel: tpu_custom_call.1
$region0: #{tpu_custom_call.1}
  #allocation0 [shape = 'u32[]', space=smem, size = 0x4, offset = 0x4, fixed_abs, tag = 'smem constant byte address 0x4 - core index']
  #allocation1 [shape = 'u32[72,128]{1,0:T(1,128)}', space=vmem, size = 0x9000, scoped, tag = 'internal scratch']
  #allocation2 [shape = 'f32[1]{0:T(128)S(6)}', space=smem, size = 0x200, scoped, tag = 'scoped memory for tpu_custom_call.1']
  %s0 = inlined_call_operand.vmem [shape: f32[8,32], index: 0, kind: input, shape index: {}]
  %s1 = inlined_call_operand.vmem [shape: f32[32,1], index: 1, kind: input, shape index: {}]
  %s2 = inlined_call_operand.<no memory space> [shape: f32[1], index: 2, kind: input, shape index: {}]
  %s3 = inlined_call_operand.vmem [shape: f32[8,1], index: 3, kind: output, shape index: {}]
  %s4 = sld [smem:[#allocation0]]
  $region22: #{tpu_custom_call.1} parent=0
    _
  %s6 = ssub.s32 1, %s4
  %s7 = scalar_select 0, %s6, %s4
  %8 = sst [smem:[#allocation2]] %s2
  // Predicated region
  $region2: #{tpu_custom_call.1} parent=0 // pred_check
    _
  $region3: #{tpu_custom_call.1} parent=0 // pred_check_branch
    %10 = sbr.rel (0) target = $region5
  $region4: #{tpu_custom_call.1} parent=0 // pred_region
    _
  $region5: #{tpu_custom_call.1} parent=0 // pred_fallthru
    _
  // Predicated region
  $region6: #{tpu_custom_call.1} parent=0 // pred_check
    _
  $region7: #{tpu_custom_call.1} parent=0 // pred_check_branch
    %12 = sbr.rel (0) target = $region9
  $region8: #{tpu_custom_call.1} parent=0 // pred_region
    _
  $region9: #{tpu_custom_call.1} parent=0 // pred_fallthru
    _
  // Predicated region
  $region10: #{tpu_custom_call.1} parent=0 // pred_check
    _
  $region11: #{tpu_custom_call.1} parent=0 // pred_check_branch
    %14 = sbr.rel (0) target = $region13
  $region12: #{tpu_custom_call.1} parent=0 // pred_region
    _
  $region13: #{tpu_custom_call.1} parent=0 // pred_fallthru
    _
  %v15 = vld [vmem:[%s0] sm:$0xff]
  %v16 = vld [vmem:[%s1] sm:$0xff]
  %v17 = vld [vmem:[%s1 + $0x8] sm:$0xff]
  %v18 = vld [vmem:[%s1 + $0x10] sm:$0xff]
  %v19 = vld [vmem:[%s1 + $0x18] sm:$0xff]
  %s20 = sld [smem:[#allocation2]]
  %v21 = vstv %s20
  %vm22 = vcmask 261120
  %v24 = vsel %vm22, %v15, 0
  %26 = vmatpush.msra.mxu0 0.0
  %27 = vmatpush.msra.mxu0 0.0
  %28 = vmatpush.msra.mxu0 0.0
  %29 = vmatpush.msra.mxu0 0.0
  %30 = vmatpush.msra.mxu0 0.0
  %31 = vmatpush.msra.mxu0 0.0
  %32 = vmatpush.msra.mxu0 0.0
  %33 = vmatpush.msra.mxu0 0.0
  %34 = vmatpush.msra.mxu0 0.0
  %35 = vmatpush.msra.mxu0 0.0
  %36 = vmatpush.msra.mxu0 0.0
  %37 = vmatpush.msra.mxu0 0.0
  %38 = vmatpush.msra.mxu0 %v19
  %39 = vmatpush.msra.mxu0 %v18
  %40 = vmatpush.msra.mxu0 %v17
  %41 = vmatpush.msra.mxu0 %v16
  %42 = vmatmul.f32.gmra.mxu0 %v24
  %v43 = vpop.f32.mrf.mxu0
  %v44 = vadd.f32 %v21, %v43
  %45 = vdwg.mxu0
  %v46 = vxor.u32 %v44, 2147483648
  %v47 = vmul.f32 %v46, 1.442695
  %v48 = vpow.pop %v47
  %v49 = vadd.f32 %v48, 1.0
  %v50 = vrcp.pop %v49
  %v51 = vmul.f32 %v49, %v50
  %v52 = vsub.f32 1.0, %v51
  %v53 = vmul.f32 %v50, %v52
  %v54 = vadd.f32 %v50, %v53
  %vm55 = vweird.f32 %v49
  %vm56 = vweird.f32 %v50
  %vm57 = vmor %vm55, %vm56
  %v58 = vsel %vm57, %v50, %v54
  %v59 = vand.u32 2147483647, %v49
  %vm60 = vcmp.eq.f32.partialorder %v59, 8.507059e+37
  %v61 = vand.u32 %v49, 2147483648
  %v62 = vor.u32 1.1754944e-38, %v61
  %v63 = vsel %vm60, %v62, %v58
  %v64 = vmul.f32 1.0, %v63
  %vm65 = vcmask 7168
  %66 = vst.msk [vmem:[%s3] sm:$0xff] %vm65, %v64
  // Predicated region
  $region14: #{tpu_custom_call.1} parent=0 // pred_check
    _
  $region15: #{tpu_custom_call.1} parent=0 // pred_check_branch
    %68 = sbr.rel (0) target = $region17
  $region16: #{tpu_custom_call.1} parent=0 // pred_region
    _
  $region17: #{tpu_custom_call.1} parent=0 // pred_fallthru
    _
  // Predicated region
  $region18: #{tpu_custom_call.1} parent=0 // pred_check
    _
  $region19: #{tpu_custom_call.1} parent=0 // pred_check_branch
    %70 = sbr.rel (0) target = $region21
  $region20: #{tpu_custom_call.1} parent=0 // pred_region
    _
  $region21: #{tpu_custom_call.1} parent=0 // pred_fallthru
    _

</llo_original>
